<compile_context>
chip_gen: v7x
topology: tpu7x:2x2x1
jax: 0.10.0
libtpu: 0.0.40
codegen_flags: <defaults>
</compile_context>

<pallas_src>
import functools

import jax
import jax.numpy as jnp
from jax import lax
from jax.experimental import pallas as pl
from jax.experimental.pallas import tpu as pltpu

LANE = 128
_VMEM_LIMIT = 32 * 1024 * 1024


def _round_up(v, m):
    return ((v + m - 1) // m) * m


# ----------------------------------------------------------------------------
# Kernel 1: fused self/neighbor projection   p = x @ [W_self | W_neigh]
# ----------------------------------------------------------------------------
def _project_kernel(x_ref, w_ref, ps_ref, pn_ref, *, h_pad):
    # x_ref: (TM, F) bf16, w_ref: (F, 2*h_pad) bf16 -> f32 accumulation on MXU.
    p = jnp.dot(x_ref[...], w_ref[...], preferred_element_type=jnp.float32)
    ps_ref[...] = p[:, :h_pad]                              # self path (f32)
    pn_ref[...] = p[:, h_pad:].astype(pn_ref.dtype)         # neighbor path (bf16)


def _project(x, w_packed, h_pad, tm):
    n, f = x.shape
    cost = pl.CostEstimate(
        flops=2 * n * f * (2 * h_pad),
        transcendentals=0,
        bytes_accessed=n * f * 2 + f * (2 * h_pad) * 2 + n * h_pad * (4 + 2),
    )
    return pl.pallas_call(
        functools.partial(_project_kernel, h_pad=h_pad),
        out_shape=(jax.ShapeDtypeStruct((n, h_pad), jnp.float32),
                   jax.ShapeDtypeStruct((n, h_pad), jnp.bfloat16)),
        grid=(n // tm,),
        in_specs=[pl.BlockSpec((tm, f), lambda i: (i, 0)),
                  pl.BlockSpec((f, 2 * h_pad), lambda i: (0, 0))],
        out_specs=(pl.BlockSpec((tm, h_pad), lambda i: (i, 0)),
                   pl.BlockSpec((tm, h_pad), lambda i: (i, 0))),
        compiler_params=pltpu.CompilerParams(
            dimension_semantics=("parallel",),
            vmem_limit_bytes=_VMEM_LIMIT),
        cost_estimate=cost,
    )(x, w_packed)


# ----------------------------------------------------------------------------
# Kernel 2: mean aggregation + bias + activation
#   out_tile = act( A[tile, :] @ p_neigh + p_self[tile] + b )
# grid = (dst row tiles ["parallel"], src reduction tiles ["arbitrary"])
# ----------------------------------------------------------------------------
def _aggregate_kernel(a_ref, pn_ref, ps_ref, b_ref, out_ref, acc_ref,
                      *, final, num_valid):
    k = pl.program_id(1)

    @pl.when(k == 0)
    def _():
        acc_ref[...] = jnp.zeros_like(acc_ref)

    acc_ref[...] += jnp.dot(a_ref[...], pn_ref[...],
                            preferred_element_type=jnp.float32)

    @pl.when(k == pl.num_programs(1) - 1)
    def _():
        h = acc_ref[...] + ps_ref[...] + b_ref[...]          # f32 element-wise
        if not final:
            out_ref[...] = jnp.maximum(h, 0.0).astype(out_ref.dtype)
        else:
            # log_softmax over the first `num_valid` (real class) lanes only.
            col = lax.broadcasted_iota(jnp.int32, h.shape, 1)
            h = jnp.where(col < num_valid, h, -1e30)
            m = jnp.max(h, axis=1, keepdims=True)
            z = h - m
            lse = jnp.log(jnp.sum(jnp.exp(z), axis=1, keepdims=True))
            out_ref[...] = (z - lse).astype(out_ref.dtype)


def _aggregate(adj, p_neigh, p_self, bias, *, tm, tk, final, num_valid,
               out_dtype):
    n = adj.shape[0]
    h_pad = p_neigh.shape[1]
    out_bytes = n * h_pad * jnp.dtype(out_dtype).itemsize
    cost = pl.CostEstimate(
        flops=2 * n * n * h_pad,
        transcendentals=(2 * n * h_pad) if final else 0,
        bytes_accessed=n * n * 2 + n * h_pad * (2 + 4) + out_bytes + h_pad * 4,
    )
    kern = functools.partial(_aggregate_kernel, final=final,
                             num_valid=num_valid)
    return pl.pallas_call(
        kern,
        out_shape=jax.ShapeDtypeStruct((n, h_pad), out_dtype),
        grid=(n // tm, n // tk),
        in_specs=[pl.BlockSpec((tm, tk), lambda i, k: (i, k)),       # A tile
                  pl.BlockSpec((tk, h_pad), lambda i, k: (k, 0)),    # neigh proj
                  pl.BlockSpec((tm, h_pad), lambda i, k: (i, 0)),    # self proj
                  pl.BlockSpec((1, h_pad), lambda i, k: (0, 0))],    # bias
        out_specs=pl.BlockSpec((tm, h_pad), lambda i, k: (i, 0)),
        scratch_shapes=[pltpu.VMEM((tm, h_pad), jnp.float32)],
        compiler_params=pltpu.CompilerParams(
            dimension_semantics=("parallel", "arbitrary"),
            vmem_limit_bytes=_VMEM_LIMIT),
        cost_estimate=cost,
    )(adj, p_neigh, p_self, bias)


# ----------------------------------------------------------------------------
# Full forward pass
# ----------------------------------------------------------------------------
def simple_gnn_sage(x, adj, params, *, tile=256):
    """x: [N, F] float32, adj: [N, N] row-normalized float32."""
    n, f = x.shape
    h = params["w1_self"].shape[1]
    c = params["w2_self"].shape[1]
    h_pad = _round_up(h, LANE)
    c_pad = _round_up(c, LANE)

    # Row / reduction tile size; pad N so the grid divides evenly.
    if n <= tile:
        t = _round_up(n, 8)
        n_pad = t
    else:
        t = tile
        n_pad = _round_up(n, t)

    # Pad inputs (extra rows/cols are zero -> contribute nothing, sliced off).
    x_p = jnp.zeros((n_pad, f), jnp.bfloat16).at[:n, :].set(
        x.astype(jnp.bfloat16))
    a_p = jnp.zeros((n_pad, n_pad), jnp.bfloat16).at[:n, :n].set(
        adj.astype(jnp.bfloat16))

    def pad_cols(w, cols):
        return jnp.zeros((w.shape[0], cols), w.dtype).at[:, :w.shape[1]].set(w)

    # Layer 1: packed [W_self | W_neigh], columns zero-padded to lane width.
    w1 = jnp.concatenate(
        [pad_cols(params["w1_self"], h_pad),
         pad_cols(params["w1_neigh"], h_pad)], axis=1).astype(jnp.bfloat16)
    b1 = pad_cols(params["b1"], h_pad).astype(jnp.float32)

    # Layer 2: pad K from h -> h_pad (extra h1 columns are exactly zero).
    w2s = pad_cols(params["w2_self"], c_pad)
    w2n = pad_cols(params["w2_neigh"], c_pad)
    w2 = jnp.zeros((h_pad, 2 * c_pad), jnp.float32)
    w2 = w2.at[:h, :c_pad].set(w2s).at[:h, c_pad:].set(w2n).astype(jnp.bfloat16)
    b2 = pad_cols(params["b2"], c_pad).astype(jnp.float32)

    # ---- layer 1: SAGEConv(F -> 16) + relu ----
    p1s, p1n = _project(x_p, w1, h_pad, t)
    h1 = _aggregate(a_p, p1n, p1s, b1, tm=t, tk=t,
                    final=False, num_valid=h, out_dtype=jnp.bfloat16)

    # ---- layer 2: SAGEConv(16 -> C) + log_softmax ----
    p2s, p2n = _project(h1, w2, c_pad, t)
    out = _aggregate(a_p, p2n, p2s, b2, tm=t, tk=t,
                     final=True, num_valid=c, out_dtype=jnp.float32)

    return out[:n, :c]


# ----------------------------------------------------------------------------
# Plain-JAX helpers (graph preprocessing + parameter init)
# ----------------------------------------------------------------------------
def edge_index_to_mean_adj(edge_index, num_nodes):
    """edge_index: [2, E] int32 (row 0 = source, row 1 = target).
    A[i, j] = (#edges j->i) / deg_in(i)  (mean aggregation)."""
    src, dst = edge_index[0], edge_index[1]
    adj = jnp.zeros((num_nodes, num_nodes), jnp.float32).at[dst, src].add(1.0)
    deg = jnp.sum(adj, axis=1, keepdims=True)
    return adj / jnp.maximum(deg, 1.0)


def init_params(key, num_features, num_classes, hidden=16):
    ks = jax.random.split(key, 6)

    def glorot(k, shape):
        lim = (6.0 / (shape[0] + shape[1])) ** 0.5
        return jax.random.uniform(k, shape, jnp.float32, -lim, lim)

    return {
        "w1_self":  glorot(ks[0], (num_features, hidden)),
        "w1_neigh": glorot(ks[1], (num_features, hidden)),
        "b1":       jnp.zeros((1, hidden), jnp.float32),
        "w2_self":  glorot(ks[2], (hidden, num_classes)),
        "w2_neigh": glorot(ks[3], (hidden, num_classes)),
        "b2":       jnp.zeros((1, num_classes), jnp.float32),
    }


if __name__ == "__main__":
    key = jax.random.PRNGKey(0)
    k_x, k_e, k_p = jax.random.split(key, 3)

    num_nodes = 16
    num_features = 8
    num_classes = 4
    num_edges = 40

    x = jax.random.normal(k_x, (num_nodes, num_features), jnp.float32)
    edge_index = jax.random.randint(k_e, (2, num_edges), 0, num_nodes,
                                    jnp.int32)

    adj = edge_index_to_mean_adj(edge_index, num_nodes)
    params = init_params(k_p, num_features, num_classes, hidden=16)

    out = simple_gnn_sage(x, adj, params)
    out = jax.block_until_ready(out)

    # quick sanity: log_softmax rows should sum (in prob space) to ~1
    assert out.shape == (num_nodes, num_classes)
    row_prob_sums = jnp.sum(jnp.exp(out), axis=1)
    assert bool(jnp.all(jnp.abs(row_prob_sums - 1.0) < 1e-4))

    print("KERNEL_OK")
</pallas_src>

<mosaic_0001>
module attributes {stable_mosaic.version = 11 : i64} {
  func.func @_project_kernel(%arg0: i32, %arg1: memref<16x8xbf16, #tpu.memory_space<vmem>>, %arg2: memref<8x256xbf16, #tpu.memory_space<vmem>>, %arg3: memref<16x128xf32, #tpu.memory_space<vmem>>, %arg4: memref<16x128xbf16, #tpu.memory_space<vmem>>) attributes {dimension_semantics = [#tpu.dimension_semantics<parallel>], iteration_bounds = array<i64: 1>, scalar_prefetch = 0 : i64, scratch_operands = 0 : i64, tpu.core_type = #tpu.core_type<tc>, window_params = [{transform_indices = @transform_0, window_bounds = array<i64: 16, 8>}, {pipeline_mode = #tpu.pipeline_mode<synchronous>, transform_indices = @transform_1, window_bounds = array<i64: 8, 256>}, {transform_indices = @transform_2, window_bounds = array<i64: 16, 128>}, {transform_indices = @transform_3, window_bounds = array<i64: 16, 128>}]} {
    %c0 = arith.constant 0 : index
    %c0_0 = arith.constant 0 : index
    %0 = vector.load %arg1[%c0, %c0_0] : memref<16x8xbf16, #tpu.memory_space<vmem>>, vector<16x8xbf16>
    %c0_1 = arith.constant 0 : index
    %c0_2 = arith.constant 0 : index
    %1 = vector.load %arg2[%c0_1, %c0_2] : memref<8x256xbf16, #tpu.memory_space<vmem>>, vector<8x256xbf16>
    %cst = arith.constant dense<0.000000e+00> : vector<16x256xf32>
    %2 = tpu.matmul %0, %1, %cst {dimension_numbers = #tpu.dot_dimension_numbers<[1], [0], [0], [1], [0, 0, 1, 1], [], []>} : vector<16x8xbf16>, vector<8x256xbf16>, vector<16x256xf32> -> vector<16x256xf32>
    %3 = vector.extract_strided_slice %2 {offsets = [0, 0], sizes = [16, 128], strides = [1, 1]} : vector<16x256xf32> to vector<16x128xf32>
    %c0_3 = arith.constant 0 : index
    %c0_4 = arith.constant 0 : index
    %4 = vector.load %arg3[%c0_3, %c0_4] : memref<16x128xf32, #tpu.memory_space<vmem>>, vector<16x128xf32>
    tpu.vector_store %arg3[%c0_3, %c0_4], %3 {strides = array<i32>} : memref<16x128xf32, #tpu.memory_space<vmem>>, vector<16x128xf32>,
    %5 = vector.extract_strided_slice %2 {offsets = [0, 128], sizes = [16, 128], strides = [1, 1]} : vector<16x256xf32> to vector<16x128xf32>
    %6 = arith.truncf %5 : vector<16x128xf32> to vector<16x128xbf16>
    %c0_5 = arith.constant 0 : index
    %c0_6 = arith.constant 0 : index
    %7 = vector.load %arg4[%c0_5, %c0_6] : memref<16x128xbf16, #tpu.memory_space<vmem>>, vector<16x128xbf16>
    tpu.vector_store %arg4[%c0_5, %c0_6], %6 {strides = array<i32>} : memref<16x128xbf16, #tpu.memory_space<vmem>>, vector<16x128xbf16>,
    return
  }
  func.func @transform_0(%arg0: i32) -> (i32, i32) {
    %c0_i32 = arith.constant 0 : i32
    %c0_i32_0 = arith.constant 0 : i32
    return %arg0, %c0_i32 : i32, i32
  }
  func.func @transform_1(%arg0: i32) -> (i32, i32) {
    %c0_i32 = arith.constant 0 : i32
    %c0_i32_0 = arith.constant 0 : i32
    %c0_i32_1 = arith.constant 0 : i32
    return %c0_i32, %c0_i32_0 : i32, i32
  }
  func.func @transform_2(%arg0: i32) -> (i32, i32) {
    %c0_i32 = arith.constant 0 : i32
    %c0_i32_0 = arith.constant 0 : i32
    return %arg0, %c0_i32 : i32, i32
  }
  func.func @transform_3(%arg0: i32) -> (i32, i32) {
    %c0_i32 = arith.constant 0 : i32
    %c0_i32_0 = arith.constant 0 : i32
    return %arg0, %c0_i32 : i32, i32
  }
}

</mosaic_0001>

<llo_original>
// kernel: tpu_custom_call.1
$region0: #{tpu_custom_call.1}
  #allocation0 [shape = 'u32[]', space=smem, size = 0x4, offset = 0x4, fixed_abs, tag = 'smem constant byte address 0x4 - core index']
  #allocation1 [shape = 'u32[144,128]{1,0:T(1,128)}', space=vmem, size = 0x12000, scoped, tag = 'internal scratch']
  %s0 = inlined_call_operand.vmem [shape: bf16[16,8], index: 0, kind: input, shape index: {}]
  %s1 = inlined_call_operand.vmem [shape: bf16[8,256], index: 1, kind: input, shape index: {}]
  %s2 = inlined_call_operand.hbm [shape: f32[16,128], index: 2, kind: output, shape index: {0}]
  %s3 = inlined_call_operand.hbm [shape: bf16[16,128], index: 3, kind: output, shape index: {1}]
  %4 = xla_tuple %s2, %s3
  %s5 = sld [smem:[#allocation0]]
  $region26: #{tpu_custom_call.1} parent=0
    _
  %s7 = ssub.s32 1, %s5
  %s8 = scalar_select 0, %s7, %s5
  $region1: #{tpu_custom_call.1} parent=0
    #allocation2 [shape = 'u8[8192]{0}', space=vmem, size = 0x2000, scoped, tag = 'output window, operand 0, single buffered']
    #allocation3 [shape = 's32[1]{0}', space=sflag, size = 0x4, scoped, tag = 'scoped memory for tpu_custom_call.1']
    #allocation4 [shape = 'u8[4096]{0}', space=vmem, size = 0x1000, scoped, tag = 'output window, operand 1, single buffered']
    #allocation5 [shape = 's32[1]{0}', space=sflag, size = 0x4, scoped, tag = 'scoped memory for tpu_custom_call.1']
    %9 = vsyncpa [#allocation3], 0
    %10 = vsyncpa [#allocation5], 0
    // Predicated region
    $region2: #{tpu_custom_call.1} parent=1 // pred_check
      _
    $region3: #{tpu_custom_call.1} parent=1 // pred_check_branch
      %12 = sbr.rel (0) target = $region5
    $region4: #{tpu_custom_call.1} parent=1 // pred_region
      _
    $region5: #{tpu_custom_call.1} parent=1 // pred_fallthru
      _
    // Predicated region
    $region6: #{tpu_custom_call.1} parent=1 // pred_check
      _
    $region7: #{tpu_custom_call.1} parent=1 // pred_check_branch
      %14 = sbr.rel (0) target = $region9
    $region8: #{tpu_custom_call.1} parent=1 // pred_region
      _
    $region9: #{tpu_custom_call.1} parent=1 // pred_fallthru
      _
    %v16 = vld [vmem:[%s0] sm:$0xf]
    %v17 = vld [vmem:[%s0 + $0x4] sm:$0xf]
    %v18 = vld [vmem:[%s1] sm:$0xff]
    %v21 = vunpack.c.l.b16 %v16
    %v22 = vunpack.c.l.b16 %v17
    %v23 = vpack.c.b16 %v22, %v21
    %v25 = vunpack.c.l.b16 %v18
    %v26 = vunpack.c.h.b16 %v18
    %v27 = vpack.c.b16 %v25, %v25
    %v28 = vpack.c.b16 %v26, %v26
    %vm29 = vcmask 64512
    %v31 = vsel %vm29, %v23, 0
    %vm33 = vcmask 1043456
    %v35 = vsel %vm33, %v27, 0
    %v38 = vsel %vm33, %v28, 0
    %40 = vmatprep.subr.bf16.mxu0 %v38
    %41 = vmatpush1.bf16.msra.mxu0 %v35
    %42 = vmatprep.subr.bf16.mxu0 0
    %43 = vmatpush1.bf16.msra.mxu0 0
    %44 = vmatprep.subr.bf16.mxu0 0
    %45 = vmatpush1.bf16.msra.mxu0 0
    %46 = vmatprep.subr.bf16.mxu0 0
    %47 = vmatpush1.bf16.msra.mxu0 0
    %48 = vmatprep.subr.bf16.mxu0 0
    %49 = vmatpush1.bf16.msra.mxu0 0
    %50 = vmatprep.subr.bf16.mxu0 0
    %51 = vmatpush1.bf16.msra.mxu0 0
    %52 = vmatprep.subr.bf16.mxu0 0
    %53 = vmatpush1.bf16.msra.mxu0 0
    %54 = vmatprep.subr.bf16.mxu0 0
    %55 = vmatpush1.bf16.msra.mxu0 0
    %56 = vmatprep.subr.bf16.mxu0 0
    %57 = vmatpush1.bf16.msra.mxu0 0
    %58 = vmatprep.subr.bf16.mxu0 0
    %59 = vmatpush1.bf16.msra.mxu0 0
    %60 = vmatprep.subr.bf16.mxu0 0
    %61 = vmatpush1.bf16.msra.mxu0 0
    %62 = vmatprep.subr.bf16.mxu0 0
    %63 = vmatpush1.bf16.msra.mxu0 0
    %64 = vmatprep.subr.bf16.mxu0 0
    %65 = vmatpush1.bf16.msra.mxu0 0
    %66 = vmatprep.subr.bf16.mxu0 0
    %67 = vmatpush1.bf16.msra.mxu0 0
    %68 = vmatprep.subr.bf16.mxu0 0
    %69 = vmatpush1.bf16.msra.mxu0 0
    %70 = vmatprep.subr.bf16.mxu0 0
    %71 = vmatpush1.bf16.msra.mxu0 0
    %72 = vmatprep.mubr.bf16.mxu0 0
    %73 = vmatmul.mubr.bf16.gmra.mrb[0].mxu0 %v31
    %v74 = vpop.f32.mrb[0].mxu0
    %v75 = vadd.f32 0.0, %v74
    %v76 = vpop.f32.mrb[0].mxu0
    %v77 = vadd.f32 0.0, %v76
    %v78 = vpop.f32.mrb[0].mxu0
    %v79 = vadd.f32 0.0, %v78
    %v80 = vpop.f32.mrb[0].mxu0
    %v81 = vadd.f32 0.0, %v80
    %82 = vdwg.mxu0
    %83 = vst [vmem:[#allocation2] sm:$0xff] %v75
    %84 = vst [vmem:[#allocation2 + $0x8] sm:$0xff] %v79
    %v85 = vpack.c.bf16 %v81, %v77
    %v87 = vunpack.c.l.b16 %v85
    %v88 = vunpack.c.h.b16 %v85
    %v89 = vpack.c.b16 %v87, %v87
    %v90 = vpack.c.b16 %v88, %v88
    %93 = vst [vmem:[#allocation4] sm:$0xf] %v89
    %94 = vst [vmem:[#allocation4 + $0x4] sm:$0xf] %v90
    // Predicated region
    $region10: #{tpu_custom_call.1} parent=1 // pred_check
      _
    $region11: #{tpu_custom_call.1} parent=1 // pred_check_branch
      %96 = sbr.rel (0) target = $region13
    $region12: #{tpu_custom_call.1} parent=1 // pred_region
      %s98 = ssub.s32 256, 256
      %99 = vsyncadd [#allocation3], %s98
      %s100 = sshll.u32 [#allocation2], 4
      %s101 = int_to_ptr.vmem [resolvable:$true] %s100
      %106 = dma.vmem_to_hbm [thread:$0]  %s101, 256, %s2, [#allocation3], 128, 128, 8
    $region13: #{tpu_custom_call.1} parent=1 // pred_fallthru
      _
    // Predicated region
    $region14: #{tpu_custom_call.1} parent=1 // pred_check
      _
    $region15: #{tpu_custom_call.1} parent=1 // pred_check_branch
      %108 = sbr.rel (0) target = $region17
    $region16: #{tpu_custom_call.1} parent=1 // pred_region
      %s110 = ssub.s32 128, 128
      %111 = vsyncadd [#allocation5], %s110
      %s112 = sshll.u32 [#allocation4], 4
      %s113 = int_to_ptr.vmem [resolvable:$true] %s112
      %118 = dma.vmem_to_hbm [thread:$0]  %s113, 128, %s3, [#allocation5], 64, 64, 4
    $region17: #{tpu_custom_call.1} parent=1 // pred_fallthru
      _
    // Predicated region
    $region18: #{tpu_custom_call.1} parent=1 // pred_check
      _
    $region19: #{tpu_custom_call.1} parent=1 // pred_check_branch
      %120 = sbr.rel (0) target = $region21
    $region20: #{tpu_custom_call.1} parent=1 // pred_region
      %121 = dma.done [#allocation3], 256
    $region21: #{tpu_custom_call.1} parent=1 // pred_fallthru
      _
    // Predicated region
    $region22: #{tpu_custom_call.1} parent=1 // pred_check
      _
    $region23: #{tpu_custom_call.1} parent=1 // pred_check_branch
      %123 = sbr.rel (0) target = $region25
    $region24: #{tpu_custom_call.1} parent=1 // pred_region
      %124 = dma.done [#allocation5], 128
    $region25: #{tpu_custom_call.1} parent=1 // pred_fallthru
      _
    %125 = vsyncpa [#allocation3], 1
    %126 = vsyncpa [#allocation5], 1

</llo_original>
